<compile_context>
chip_gen: v6e
topology: v6e:2x2x1
jax: 0.10.0
libtpu: 0.0.40
codegen_flags: <defaults>
</compile_context>

<pallas_src>
import math

import jax
import jax.numpy as jnp
from jax.experimental import pallas as pl
from jax.experimental.pallas import tpu as pltpu


def _round_up(a, b):
    return ((a + b - 1) // b) * b


def _ape_kernel(x_ref, w1_ref, b1_ref, w2_ref, b2_ref, o_ref):
    # x_ref : (TM, P)       packed z positions (MXU dtype, e.g. bf16)
    # w1_ref: (P, P*H)      block-diagonal Linear(1 -> H) weight (MXU dtype)
    # b1_ref: (1, P*H)      tiled bias (f32)
    # w2_ref: (P*H, P*D)    block-diagonal Linear(H -> D) weight (MXU dtype)
    # b2_ref: (1, P*D)      tiled bias (f32)
    # o_ref : (TM, P*D)     lane-dense output slab (P*D multiple of 128)
    h = jnp.dot(x_ref[...], w1_ref[...], preferred_element_type=jnp.float32)
    h = jnp.maximum(h + b1_ref[...], 0.0)                 # bias + ReLU in f32
    out = jnp.dot(h.astype(w2_ref.dtype), w2_ref[...],
                  preferred_element_type=jnp.float32)
    o_ref[...] = (out + b2_ref[...]).astype(o_ref.dtype)


def anatomical_position_encoding(z_positions, w1, b1, w2, b2, *,
                                 tile_rows=2048,
                                 mxu_dtype=jnp.bfloat16,
                                 out_dtype=None):
    """z_positions: (..., 1) float -> (..., feature_dim).

    w1: (1, H), b1: (1, H), w2: (H, D), b2: (1, D)  [== PyTorch weights^T]
    tile_rows: packed rows per grid step (sweep ~2048-8192 per generation).
    mxu_dtype: dtype of the matmul operands (bf16 recommended; f32 accumulate).
    out_dtype: output dtype (defaults to z_positions.dtype).
    """
    lead = z_positions.shape[:-1]
    assert z_positions.shape[-1] == 1
    M = 1
    for d in lead:
        M *= int(d)
    H = w1.shape[1]
    D = w2.shape[1]
    out_dtype = z_positions.dtype if out_dtype is None else out_dtype

    # ---- pack factor -------------------------------------------------------
    # Smallest P making the output slab lane-dense (P*D % 128 == 0), then
    # widened so the second matmul's K dim (P*H) fills a 128-deep MXU pass.
    P = math.lcm(D, 128) // D
    if P * H < 128 and 128 % (P * H) == 0:
        P *= 128 // (P * H)

    # ---- block-diagonal / tiled parameters (tiny; built once per call) -----
    eye_p = jnp.eye(P, dtype=jnp.float32)
    w1_blk = jnp.kron(eye_p, w1.astype(jnp.float32)).astype(mxu_dtype)  # (P, P*H)
    w2_blk = jnp.kron(eye_p, w2.astype(jnp.float32)).astype(mxu_dtype)  # (P*H, P*D)
    b1_t = jnp.tile(b1.astype(jnp.float32), (1, P))                     # (1, P*H)
    b2_t = jnp.tile(b2.astype(jnp.float32), (1, P))                     # (1, P*D)

    # ---- packed-row geometry ------------------------------------------------
    SUB = 16                                  # sublane quantum (bf16-safe, /8 ok)
    Mp = -(-M // P)                           # packed rows = ceil(M / P)
    tile_rows = _round_up(max(int(tile_rows), SUB), SUB)
    tm_cap = _round_up(Mp, SUB)               # never exceed total work
    # Aim for >= 2 grid steps when there's enough work (v7x has 2 TCs/chip).
    half = _round_up(-(-Mp // 2), SUB) if Mp > SUB else tm_cap
    TM = max(SUB, min(tile_rows, tm_cap, half))
    Mp_pad = _round_up(Mp, TM)
    M_pad = Mp_pad * P

    x = z_positions.reshape(M).astype(jnp.float32)
    if M_pad > M:
        x = jnp.pad(x, (0, M_pad - M))
    xp = x.reshape(Mp_pad, P).astype(mxu_dtype)

    grid = (Mp_pad // TM,)

    out = pl.pallas_call(
        _ape_kernel,
        out_shape=jax.ShapeDtypeStruct((Mp_pad, P * D), out_dtype),
        grid=grid,
        in_specs=[
            pl.BlockSpec((TM, P), lambda i: (i, 0)),        # streamed x tiles
            pl.BlockSpec((P, P * H), lambda i: (0, 0)),      # resident weights
            pl.BlockSpec((1, P * H), lambda i: (0, 0)),
            pl.BlockSpec((P * H, P * D), lambda i: (0, 0)),
            pl.BlockSpec((1, P * D), lambda i: (0, 0)),
        ],
        out_specs=pl.BlockSpec((TM, P * D), lambda i: (i, 0)),
        compiler_params=pltpu.CompilerParams(
            dimension_semantics=("parallel",),
        ),
    )(xp, w1_blk, b1_t, w2_blk, b2_t)

    out = out.reshape(M_pad, D)[:M]
    return out.reshape(*lead, D)


def _reference(z_positions, w1, b1, w2, b2):
    h = jnp.maximum(z_positions @ w1 + b1[0], 0.0)
    return h @ w2 + b2[0]


if __name__ == "__main__":
    feature_dim = 32
    hidden = feature_dim // 2
    B, S = 2, 8  # z_positions: (B, S, 1) scalar anatomical z-coordinates

    key = jax.random.PRNGKey(0)
    k_x, k_w1, k_b1, k_w2, k_b2 = jax.random.split(key, 5)

    z_positions = jax.random.normal(k_x, (B, S, 1), dtype=jnp.float32)

    # Deterministic parameter init (stand-in for nn.Linear weights, stored (in, out)).
    w1 = jax.random.normal(k_w1, (1, hidden), dtype=jnp.float32) * 0.5
    b1 = jax.random.normal(k_b1, (1, hidden), dtype=jnp.float32) * 0.1
    w2 = jax.random.normal(k_w2, (hidden, feature_dim), dtype=jnp.float32) * 0.2
    b2 = jax.random.normal(k_b2, (1, feature_dim), dtype=jnp.float32) * 0.1

    ref = _reference(z_positions, w1, b1, w2, b2)

    # Default (bf16 MXU operands) — bf16 tolerance (~1e-2 relative).
    out = jax.block_until_ready(
        anatomical_position_encoding(z_positions, w1, b1, w2, b2))
    assert out.shape == (B, S, feature_dim), out.shape
    assert jnp.allclose(out, ref, atol=5e-2, rtol=5e-2), "mismatch vs reference (bf16)"

    # f32 MXU operands — validates the block-diagonal packing bit-accurately.
    out_f32 = jax.block_until_ready(
        anatomical_position_encoding(z_positions, w1, b1, w2, b2,
                                     mxu_dtype=jnp.float32))
    assert jnp.allclose(out_f32, ref, atol=1e-5, rtol=1e-5), "mismatch vs reference (f32)"

    # Ragged M (not divisible by pack factor / tile) exercises the padding path.
    z2 = jax.random.normal(jax.random.PRNGKey(1), (3, 5, 1), dtype=jnp.float32)
    out2 = jax.block_until_ready(anatomical_position_encoding(z2, w1, b1, w2, b2))
    ref2 = _reference(z2, w1, b1, w2, b2)
    assert out2.shape == (3, 5, feature_dim), out2.shape
    assert jnp.allclose(out2, ref2, atol=5e-2, rtol=5e-2), "mismatch vs reference (ragged M)"

    print("KERNEL_OK")
</pallas_src>

<mosaic_0001>
module attributes {stable_mosaic.version = 11 : i64} {
  func.func @_ape_kernel(%arg0: i32, %arg1: memref<16x8xbf16, #tpu.memory_space<vmem>>, %arg2: memref<8x128xbf16, #tpu.memory_space<vmem>>, %arg3: memref<1x128xf32, #tpu.memory_space<vmem>>, %arg4: memref<128x256xbf16, #tpu.memory_space<vmem>>, %arg5: memref<1x256xf32, #tpu.memory_space<vmem>>, %arg6: memref<16x256xf32, #tpu.memory_space<vmem>>) attributes {dimension_semantics = [#tpu.dimension_semantics<parallel>], iteration_bounds = array<i64: 1>, scalar_prefetch = 0 : i64, scratch_operands = 0 : i64, tpu.core_type = #tpu.core_type<tc>, window_params = [{transform_indices = @transform_0, window_bounds = array<i64: 16, 8>}, {pipeline_mode = #tpu.pipeline_mode<synchronous>, transform_indices = @transform_1, window_bounds = array<i64: 8, 128>}, {pipeline_mode = #tpu.pipeline_mode<synchronous>, transform_indices = @transform_2, window_bounds = array<i64: 1, 128>}, {pipeline_mode = #tpu.pipeline_mode<synchronous>, transform_indices = @transform_3, window_bounds = array<i64: 128, 256>}, {pipeline_mode = #tpu.pipeline_mode<synchronous>, transform_indices = @transform_4, window_bounds = array<i64: 1, 256>}, {transform_indices = @transform_5, window_bounds = array<i64: 16, 256>}]} {
    %c0 = arith.constant 0 : index
    %c0_0 = arith.constant 0 : index
    %0 = vector.load %arg1[%c0, %c0_0] : memref<16x8xbf16, #tpu.memory_space<vmem>>, vector<16x8xbf16>
    %c0_1 = arith.constant 0 : index
    %c0_2 = arith.constant 0 : index
    %1 = vector.load %arg2[%c0_1, %c0_2] : memref<8x128xbf16, #tpu.memory_space<vmem>>, vector<8x128xbf16>
    %cst = arith.constant dense<0.000000e+00> : vector<16x128xf32>
    %2 = tpu.matmul %0, %1, %cst {dimension_numbers = #tpu.dot_dimension_numbers<[1], [0], [0], [1], [0, 0, 1, 1], [], []>} : vector<16x8xbf16>, vector<8x128xbf16>, vector<16x128xf32> -> vector<16x128xf32>
    %c0_3 = arith.constant 0 : index
    %c0_4 = arith.constant 0 : index
    %3 = vector.load %arg3[%c0_3, %c0_4] : memref<1x128xf32, #tpu.memory_space<vmem>>, vector<1x128xf32>
    %4 = vector.broadcast %3 : vector<1x128xf32> to vector<16x128xf32>
    %5 = arith.addf %2, %4 : vector<16x128xf32>
    %cst_5 = arith.constant 0.000000e+00 : f32
    %6 = vector.broadcast %cst_5 : f32 to vector<16x128xf32>
    %7 = arith.maximumf %5, %6 : vector<16x128xf32>
    %8 = arith.truncf %7 : vector<16x128xf32> to vector<16x128xbf16>
    %c0_6 = arith.constant 0 : index
    %c0_7 = arith.constant 0 : index
    %9 = vector.load %arg4[%c0_6, %c0_7] : memref<128x256xbf16, #tpu.memory_space<vmem>>, vector<128x256xbf16>
    %cst_8 = arith.constant dense<0.000000e+00> : vector<16x256xf32>
    %10 = tpu.matmul %8, %9, %cst_8 {dimension_numbers = #tpu.dot_dimension_numbers<[1], [0], [0], [1], [0, 0, 1, 1], [], []>} : vector<16x128xbf16>, vector<128x256xbf16>, vector<16x256xf32> -> vector<16x256xf32>
    %c0_9 = arith.constant 0 : index
    %c0_10 = arith.constant 0 : index
    %11 = vector.load %arg5[%c0_9, %c0_10] : memref<1x256xf32, #tpu.memory_space<vmem>>, vector<1x256xf32>
    %12 = vector.broadcast %11 : vector<1x256xf32> to vector<16x256xf32>
    %13 = arith.addf %10, %12 : vector<16x256xf32>
    %c0_11 = arith.constant 0 : index
    %c0_12 = arith.constant 0 : index
    %14 = vector.load %arg6[%c0_11, %c0_12] : memref<16x256xf32, #tpu.memory_space<vmem>>, vector<16x256xf32>
    tpu.vector_store %arg6[%c0_11, %c0_12], %13 {strides = array<i32>} : memref<16x256xf32, #tpu.memory_space<vmem>>, vector<16x256xf32>,
    return
  }
  func.func @transform_0(%arg0: i32) -> (i32, i32) {
    %c0_i32 = arith.constant 0 : i32
    %c0_i32_0 = arith.constant 0 : i32
    return %arg0, %c0_i32 : i32, i32
  }
  func.func @transform_1(%arg0: i32) -> (i32, i32) {
    %c0_i32 = arith.constant 0 : i32
    %c0_i32_0 = arith.constant 0 : i32
    %c0_i32_1 = arith.constant 0 : i32
    return %c0_i32, %c0_i32_0 : i32, i32
  }
  func.func @transform_2(%arg0: i32) -> (i32, i32) {
    %c0_i32 = arith.constant 0 : i32
    %c0_i32_0 = arith.constant 0 : i32
    %c0_i32_1 = arith.constant 0 : i32
    return %c0_i32, %c0_i32_0 : i32, i32
  }
  func.func @transform_3(%arg0: i32) -> (i32, i32) {
    %c0_i32 = arith.constant 0 : i32
    %c0_i32_0 = arith.constant 0 : i32
    %c0_i32_1 = arith.constant 0 : i32
    return %c0_i32, %c0_i32_0 : i32, i32
  }
  func.func @transform_4(%arg0: i32) -> (i32, i32) {
    %c0_i32 = arith.constant 0 : i32
    %c0_i32_0 = arith.constant 0 : i32
    %c0_i32_1 = arith.constant 0 : i32
    return %c0_i32, %c0_i32_0 : i32, i32
  }
  func.func @transform_5(%arg0: i32) -> (i32, i32) {
    %c0_i32 = arith.constant 0 : i32
    %c0_i32_0 = arith.constant 0 : i32
    return %arg0, %c0_i32 : i32, i32
  }
}

</mosaic_0001>

<llo_original>
// kernel: tpu_custom_call.1
$region0: #{tpu_custom_call.1}
  #allocation0 [shape = 'u32[]', space=smem, size = 0x4, offset = 0x4, fixed_abs, tag = 'smem constant byte address 0x4 - core index']
  #allocation1 [shape = 'u32[144,128]{1,0:T(1,128)}', space=vmem, size = 0x12000, scoped, tag = 'internal scratch']
  %s0 = inlined_call_operand.vmem [shape: bf16[16,8], index: 0, kind: input, shape index: {}]
  %s1 = inlined_call_operand.vmem [shape: bf16[8,128], index: 1, kind: input, shape index: {}]
  %s2 = inlined_call_operand.vmem [shape: f32[1,128], index: 2, kind: input, shape index: {}]
  %s3 = inlined_call_operand.hbm [shape: bf16[128,256], index: 3, kind: input, shape index: {}]
  %s4 = inlined_call_operand.vmem [shape: f32[1,256], index: 4, kind: input, shape index: {}]
  %s5 = inlined_call_operand.hbm [shape: f32[16,256], index: 5, kind: output, shape index: {}]
  %s6 = sld [smem:[#allocation0]]
  $region34: #{tpu_custom_call.1} parent=0
    _
  %s8 = ssub.s32 1, %s6
  %s9 = scalar_select 0, %s8, %s6
  $region1: #{tpu_custom_call.1} parent=0
    #allocation2 [shape = 'u8[65536]{0}', space=vmem, size = 0x10000, scoped, tag = 'input window, operand 3, single buffered']
    #allocation3 [shape = 's32[1]{0}', space=sflag, size = 0x4, scoped, tag = 'scoped memory for tpu_custom_call.1']
    #allocation4 [shape = 's32[1]{0}', space=sflag, size = 0x4, scoped, tag = 'scoped memory for tpu_custom_call.1']
    #allocation5 [shape = 'u8[16384]{0}', space=vmem, size = 0x4000, scoped, tag = 'output window, operand 0, single buffered']
    %10 = vsyncpa [#allocation3], 0
    %11 = vsyncpa [#allocation4], 0
    // Predicated region
    $region2: #{tpu_custom_call.1} parent=1 // pred_check
      _
    $region3: #{tpu_custom_call.1} parent=1 // pred_check_branch
      %13 = sbr.rel (0) target = $region5
    $region4: #{tpu_custom_call.1} parent=1 // pred_region
      _
    $region5: #{tpu_custom_call.1} parent=1 // pred_fallthru
      _
    // Predicated region
    $region6: #{tpu_custom_call.1} parent=1 // pred_check
      _
    $region7: #{tpu_custom_call.1} parent=1 // pred_check_branch
      %15 = sbr.rel (0) target = $region9
    $region8: #{tpu_custom_call.1} parent=1 // pred_region
      _
    $region9: #{tpu_custom_call.1} parent=1 // pred_fallthru
      _
    // Predicated region
    $region10: #{tpu_custom_call.1} parent=1 // pred_check
      _
    $region11: #{tpu_custom_call.1} parent=1 // pred_check_branch
      %17 = sbr.rel (0) target = $region13
    $region12: #{tpu_custom_call.1} parent=1 // pred_region
      _
    $region13: #{tpu_custom_call.1} parent=1 // pred_fallthru
      _
    // Predicated region
    $region14: #{tpu_custom_call.1} parent=1 // pred_check
      _
    $region15: #{tpu_custom_call.1} parent=1 // pred_check_branch
      %19 = sbr.rel (0) target = $region17
    $region16: #{tpu_custom_call.1} parent=1 // pred_region
      %s21 = ssub.s32 2048, 2048
      %22 = vsyncadd [#allocation3], %s21
      %s23 = sshll.u32 [#allocation2], 4
      %s24 = int_to_ptr.vmem [resolvable:$true] %s23
      %29 = dma.hbm_to_vmem [thread:$0]  %s3, 2048, %s24, [#allocation3], 128, 128, 8
    $region17: #{tpu_custom_call.1} parent=1 // pred_fallthru
      _
    // Predicated region
    $region18: #{tpu_custom_call.1} parent=1 // pred_check
      _
    $region19: #{tpu_custom_call.1} parent=1 // pred_check_branch
      %31 = sbr.rel (0) target = $region21
    $region20: #{tpu_custom_call.1} parent=1 // pred_region
      _
    $region21: #{tpu_custom_call.1} parent=1 // pred_fallthru
      _
    // Predicated region
    $region22: #{tpu_custom_call.1} parent=1 // pred_check
      _
    $region23: #{tpu_custom_call.1} parent=1 // pred_check_branch
      %33 = sbr.rel (0) target = $region25
    $region24: #{tpu_custom_call.1} parent=1 // pred_region
      %34 = dma.done [#allocation3], 2048
    $region25: #{tpu_custom_call.1} parent=1 // pred_fallthru
      _
    %v36 = vld [vmem:[%s0] sm:$0xf]
    %v37 = vld [vmem:[%s0 + $0x4] sm:$0xf]
    %v38 = vld [vmem:[%s1] sm:$0xf]
    %v39 = vld [vmem:[%s2] sm:$0x1]
    %v41 = vlaneseq
    %v42 = vshrl.u32 %v41, 7
    %v43 = vsub.s32 0, %v42
    %v44 = vrot.slane %v39, %v43
    %v48 = vunpack.c.l.b16 %v36
    %v49 = vunpack.c.l.b16 %v37
    %v50 = vpack.c.b16 %v49, %v48
    %vm51 = vcmask 64512
    %v53 = vsel %vm51, %v50, 0
    %vm55 = vcmask 1043456
    %v57 = vsel %vm55, %v38, 0
    %59 = vmatprep.subr.bf16.mxu0 0
    %60 = vmatpush1.bf16.msra.mxu0 0
    %61 = vmatprep.subr.bf16.mxu0 0
    %62 = vmatpush1.bf16.msra.mxu0 0
    %63 = vmatprep.subr.bf16.mxu0 0
    %64 = vmatpush1.bf16.msra.mxu0 0
    %65 = vmatprep.subr.bf16.mxu0 0
    %66 = vmatpush1.bf16.msra.mxu0 0
    %67 = vmatprep.subr.bf16.mxu0 0
    %68 = vmatpush1.bf16.msra.mxu0 0
    %69 = vmatprep.subr.bf16.mxu0 0
    %70 = vmatpush1.bf16.msra.mxu0 0
    %71 = vmatprep.subr.bf16.mxu0 0
    %72 = vmatpush1.bf16.msra.mxu0 0
    %73 = vmatprep.subr.bf16.mxu0 0
    %74 = vmatpush1.bf16.msra.mxu0 %v57
    %75 = vmatprep.subr.bf16.mxu0 0
    %76 = vmatpush2.bf16.msra.mxu0 0
    %77 = vmatprep.subr.bf16.mxu0 0
    %78 = vmatpush2.bf16.msra.mxu0 0
    %79 = vmatprep.subr.bf16.mxu0 0
    %80 = vmatpush2.bf16.msra.mxu0 0
    %81 = vmatprep.subr.bf16.mxu0 0
    %82 = vmatpush2.bf16.msra.mxu0 0
    %83 = vmatprep.subr.bf16.mxu0 0
    %84 = vmatpush2.bf16.msra.mxu0 0
    %85 = vmatprep.subr.bf16.mxu0 0
    %86 = vmatpush2.bf16.msra.mxu0 0
    %87 = vmatprep.subr.bf16.mxu0 0
    %88 = vmatpush2.bf16.msra.mxu0 0
    %89 = vmatprep.subr.bf16.mxu0 0
    %90 = vmatpush2.bf16.msra.mxu0 0
    %91 = vmatprep.mubr.bf16.mxu0 0
    %92 = vmatmul.mubr.bf16.gmra.mxu0 %v53
    %v93 = vpop.f32.mrf.mxu0
    %v94 = vadd.f32 %v44, %v93
    %v95 = vpop.f32.mrf.mxu0
    %v96 = vpop.f32.mrf.mxu0
    %v97 = vadd.f32 %v44, %v96
    %v98 = vpop.f32.mrf.mxu0
    %99 = vdwg.mxu0
    %v100 = vmax.f32 %v94, 0.0
    %v101 = vmax.f32 %v97, 0.0
    %v102 = vpack.c.bf16 %v101, %v100
    %v103 = vld [vmem:[#allocation2] sm:$0xff]
    %v104 = vld [vmem:[#allocation2 + $0x8] sm:$0xff]
    %v105 = vld [vmem:[#allocation2 + $0x10] sm:$0xff]
    %v106 = vld [vmem:[#allocation2 + $0x18] sm:$0xff]
    %v107 = vld [vmem:[#allocation2 + $0x20] sm:$0xff]
    %v108 = vld [vmem:[#allocation2 + $0x28] sm:$0xff]
    %v109 = vld [vmem:[#allocation2 + $0x30] sm:$0xff]
    %v110 = vld [vmem:[#allocation2 + $0x38] sm:$0xff]
    %v111 = vld [vmem:[#allocation2 + $0x40] sm:$0xff]
    %v112 = vld [vmem:[#allocation2 + $0x48] sm:$0xff]
    %v113 = vld [vmem:[#allocation2 + $0x50] sm:$0xff]
    %v114 = vld [vmem:[#allocation2 + $0x58] sm:$0xff]
    %v115 = vld [vmem:[#allocation2 + $0x60] sm:$0xff]
    %v116 = vld [vmem:[#allocation2 + $0x68] sm:$0xff]
    %v117 = vld [vmem:[#allocation2 + $0x70] sm:$0xff]
    %v118 = vld [vmem:[#allocation2 + $0x78] sm:$0xff]
    %v119 = vld [vmem:[%s4] sm:$0x3]
    %v121 = vlaneseq
    %v122 = vshrl.u32 %v121, 7
    %v123 = vsub.s32 0, %v122
    %v124 = vrot.slane %v119, %v123
    %v125 = vlaneseq
    %v126 = vshrl.u32 %v125, 7
    %v127 = vsub.s32 1, %v126
    %v128 = vrot.slane %v119, %v127
    %v147 = vunpack.c.l.b16 %v103
    %v148 = vunpack.c.h.b16 %v103
    %v149 = vunpack.c.l.b16 %v104
    %v150 = vunpack.c.h.b16 %v104
    %v151 = vunpack.c.l.b16 %v105
    %v152 = vunpack.c.h.b16 %v105
    %v153 = vunpack.c.l.b16 %v106
    %v154 = vunpack.c.h.b16 %v106
    %v155 = vunpack.c.l.b16 %v107
    %v156 = vunpack.c.h.b16 %v107
    %v157 = vunpack.c.l.b16 %v108
    %v158 = vunpack.c.h.b16 %v108
    %v159 = vunpack.c.l.b16 %v109
    %v160 = vunpack.c.h.b16 %v109
    %v161 = vunpack.c.l.b16 %v110
    %v162 = vunpack.c.h.b16 %v110
    %v163 = vunpack.c.l.b16 %v111
    %v164 = vunpack.c.h.b16 %v111
    %v165 = vunpack.c.l.b16 %v112
    %v166 = vunpack.c.h.b16 %v112
    %v167 = vunpack.c.l.b16 %v113
    %v168 = vunpack.c.h.b16 %v113
    %v169 = vunpack.c.l.b16 %v114
    %v170 = vunpack.c.h.b16 %v114
    %v171 = vunpack.c.l.b16 %v115
    %v172 = vunpack.c.h.b16 %v115
    %v173 = vunpack.c.l.b16 %v116
    %v174 = vunpack.c.h.b16 %v116
    %v175 = vunpack.c.l.b16 %v117
    %v176 = vunpack.c.h.b16 %v117
    %v177 = vunpack.c.l.b16 %v118
    %v178 = vunpack.c.h.b16 %v118
    %v179 = vpack.c.b16 %v149, %v147
    %v180 = vpack.c.b16 %v150, %v148
    %v181 = vpack.c.b16 %v153, %v151
    %v182 = vpack.c.b16 %v154, %v152
    %v183 = vpack.c.b16 %v157, %v155
    %v184 = vpack.c.b16 %v158, %v156
    %v185 = vpack.c.b16 %v161, %v159
    %v186 = vpack.c.b16 %v162, %v160
    %v187 = vpack.c.b16 %v165, %v163
    %v188 = vpack.c.b16 %v166, %v164
    %v189 = vpack.c.b16 %v169, %v167
    %v190 = vpack.c.b16 %v170, %v168
    %v191 = vpack.c.b16 %v173, %v171
    %v192 = vpack.c.b16 %v174, %v172
    %v193 = vpack.c.b16 %v177, %v175
    %v194 = vpack.c.b16 %v178, %v176
    %211 = vmatprep.subr.bf16.mxu0 %v194
    %212 = vmatpush1.bf16.msra.mxu0 %v193
    %213 = vmatprep.subr.bf16.mxu0 %v192
    %214 = vmatpush1.bf16.msra.mxu0 %v191
    %215 = vmatprep.subr.bf16.mxu0 %v190
    %216 = vmatpush1.bf16.msra.mxu0 %v189
    %217 = vmatprep.subr.bf16.mxu0 %v188
    %218 = vmatpush1.bf16.msra.mxu0 %v187
    %219 = vmatprep.subr.bf16.mxu0 %v186
    %220 = vmatpush1.bf16.msra.mxu0 %v185
    %221 = vmatprep.subr.bf16.mxu0 %v184
    %222 = vmatpush1.bf16.msra.mxu0 %v183
    %223 = vmatprep.subr.bf16.mxu0 %v182
    %224 = vmatpush1.bf16.msra.mxu0 %v181
    %225 = vmatprep.subr.bf16.mxu0 %v180
    %226 = vmatpush1.bf16.msra.mxu0 %v179
    %227 = vmatprep.subr.bf16.mxu0 0
    %228 = vmatpush2.bf16.msra.mxu0 0
    %229 = vmatprep.subr.bf16.mxu0 0
    %230 = vmatpush2.bf16.msra.mxu0 0
    %231 = vmatprep.subr.bf16.mxu0 0
    %232 = vmatpush2.bf16.msra.mxu0 0
    %233 = vmatprep.subr.bf16.mxu0 0
    %234 = vmatpush2.bf16.msra.mxu0 0
    %235 = vmatprep.subr.bf16.mxu0 0
    %236 = vmatpush2.bf16.msra.mxu0 0
    %237 = vmatprep.subr.bf16.mxu0 0
    %238 = vmatpush2.bf16.msra.mxu0 0
    %239 = vmatprep.subr.bf16.mxu0 0
    %240 = vmatpush2.bf16.msra.mxu0 0
    %241 = vmatprep.subr.bf16.mxu0 0
    %242 = vmatpush2.bf16.msra.mxu0 0
    %243 = vmatprep.mubr.bf16.mxu0 0
    %244 = vmatmul.mubr.bf16.gmra.mxu0 %v102
    %v245 = vpop.f32.mrf.mxu0
    %v246 = vadd.f32 %v124, %v245
    %v247 = vpop.f32.mrf.mxu0
    %v248 = vadd.f32 %v128, %v247
    %v249 = vpop.f32.mrf.mxu0
    %v250 = vadd.f32 %v124, %v249
    %v251 = vpop.f32.mrf.mxu0
    %v252 = vadd.f32 %v128, %v251
    %253 = vdwg.mxu0
    %254 = vst [vmem:[#allocation5] sm:$0xff] %v246
    %255 = vst [vmem:[#allocation5 + $0x8] sm:$0xff] %v248
    %256 = vst [vmem:[#allocation5 + $0x10] sm:$0xff] %v250
    %257 = vst [vmem:[#allocation5 + $0x18] sm:$0xff] %v252
    // Predicated region
    $region26: #{tpu_custom_call.1} parent=1 // pred_check
      _
    $region27: #{tpu_custom_call.1} parent=1 // pred_check_branch
      %259 = sbr.rel (0) target = $region29
    $region28: #{tpu_custom_call.1} parent=1 // pred_region
      %s261 = ssub.s32 512, 512
      %262 = vsyncadd [#allocation4], %s261
      %s263 = sshll.u32 [#allocation5], 4
      %s264 = int_to_ptr.vmem [resolvable:$true] %s263
      %269 = dma.vmem_to_hbm [thread:$0]  %s264, 512, %s5, [#allocation4], 256, 256, 16
    $region29: #{tpu_custom_call.1} parent=1 // pred_fallthru
      _
    // Predicated region
    $region30: #{tpu_custom_call.1} parent=1 // pred_check
      _
    $region31: #{tpu_custom_call.1} parent=1 // pred_check_branch
      %271 = sbr.rel (0) target = $region33
    $region32: #{tpu_custom_call.1} parent=1 // pred_region
      %272 = dma.done [#allocation4], 512
    $region33: #{tpu_custom_call.1} parent=1 // pred_fallthru
      _
    %273 = vsyncpa [#allocation3], 1
    %274 = vsyncpa [#allocation4], 1

</llo_original>
